<compile_context>
chip_gen: v6e
topology: v6e:2x2x1
jax: 0.10.0
libtpu: 0.0.40
codegen_flags: <defaults>
</compile_context>

<pallas_src>
import jax
import jax.numpy as jnp
from jax.experimental import pallas as pl
from jax.experimental.pallas import tpu as pltpu


def _round_up(v, m):
    return ((v + m - 1) // m) * m


def gcn_kernel(adj_ref, x_ref, w1_ref, b1_ref, w2_ref, b2_ref, o_ref):
    """One graph per grid step. adj/x/w arrive in the MXU input dtype
    (bf16 by default); all matmul accumulation is f32."""
    adj = adj_ref[...]                       # [N, N]
    mxu_dtype = adj.dtype

    # Layer 1: relu( (adj @ x) @ W1 + b1 )
    # Keep this association: the N^2 aggregation contracts to input_dim,
    # which is narrower than hidden_dim.
    ax = jnp.dot(adj, x_ref[...], preferred_element_type=jnp.float32)
    h = jnp.dot(ax.astype(mxu_dtype), w1_ref[...],
                preferred_element_type=jnp.float32) + b1_ref[...]
    h = jnp.maximum(h, 0.0)

    # Layer 2, reassociated: adj @ (h @ W2) + b2  ==  (adj @ h) @ W2 + b2,
    # but the N^2 matmul's output width drops hidden_dim -> output_dim.
    hw = jnp.dot(h.astype(mxu_dtype), w2_ref[...],
                 preferred_element_type=jnp.float32)
    out = jnp.dot(adj, hw.astype(mxu_dtype),
                  preferred_element_type=jnp.float32) + b2_ref[...]

    o_ref[...] = out.astype(o_ref.dtype)


def gcn_conv_batched(x, adj, w1, b1, w2, b2, *, mxu_dtype=jnp.bfloat16):
    """Fused two-layer GCN forward over a batch of graphs.

    x:  [G, N, F_in]   adj: [G, N, N]
    w1: [F_in, H]      b1:  [1, H]       (W^T of nn.Linear fc1)
    w2: [H, F_out]     b2:  [1, F_out]   (W^T of nn.Linear fc2)
    Returns [G, N, F_out] in x.dtype.
    """
    g, n, f_in = x.shape
    h_dim = w1.shape[1]
    f_out = w2.shape[1]

    # Sublane-dense node axis: pad N to a multiple of 8 with zero rows/cols.
    # Zero adj columns x zero x rows contribute nothing to valid rows, so the
    # padded rows are inert and are sliced off below.
    n_p = _round_up(n, 8)
    if n_p != n:
        adj = jnp.pad(adj, ((0, 0), (0, n_p - n), (0, n_p - n)))
        x = jnp.pad(x, ((0, 0), (0, n_p - n), (0, 0)))

    # Lane-dense output: pad output feature dim to a multiple of 128 (zero
    # weights / zero bias in the padded columns), slice off after the call.
    f_out_p = max(128, _round_up(f_out, 128))
    w2p = jnp.zeros((h_dim, f_out_p), w2.dtype).at[:, :f_out].set(w2)
    b2p = jnp.zeros((1, f_out_p), b2.dtype).at[:, :f_out].set(b2)

    # bf16 MXU inputs (native MXU dtype on v6e/v7x; halves adj/x HBM traffic).
    # Biases stay f32 and are added to the f32 accumulators.
    adj_m = adj.astype(mxu_dtype)
    x_m = x.astype(mxu_dtype)
    w1_m = w1.astype(mxu_dtype)
    w2_m = w2p.astype(mxu_dtype)

    # TODO(synk): for large N (adj no longer one VMEM block: ~16 MiB f32 at
    # N=2048) switch to a row/col-tiled, two-pallas_call structure with an f32
    # accumulator scratch + pl.when init/finalize, budget tiles against v7x's
    # 64 MiB VMEM, and for sparse graphs use PrefetchScalarGridSpec block
    # indices to skip all-zero adj column blocks.
    out = pl.pallas_call(
        gcn_kernel,
        out_shape=jax.ShapeDtypeStruct((g, n_p, f_out_p), x.dtype),
        grid_spec=pltpu.PrefetchScalarGridSpec(
            num_scalar_prefetch=0,
            grid=(g,),
            in_specs=[
                pl.BlockSpec((None, n_p, n_p), lambda i: (i, 0, 0)),   # adj: streams
                pl.BlockSpec((None, n_p, f_in), lambda i: (i, 0, 0)),  # x:   streams
                pl.BlockSpec((f_in, h_dim), lambda i: (0, 0)),         # w1:  resident
                pl.BlockSpec((1, h_dim), lambda i: (0, 0)),            # b1:  resident
                pl.BlockSpec((h_dim, f_out_p), lambda i: (0, 0)),      # w2:  resident
                pl.BlockSpec((1, f_out_p), lambda i: (0, 0)),          # b2:  resident
            ],
            out_specs=pl.BlockSpec((None, n_p, f_out_p), lambda i: (i, 0, 0)),
        ),
        compiler_params=pltpu.CompilerParams(
            # Graphs are independent: shard grid steps across both
            # TensorCores on v7x (harmless on v5e/v6e).
            dimension_semantics=("parallel",),
        ),
    )(adj_m, x_m, w1_m, b1, w2_m, b2p)
    return out[:, :n, :f_out]


def gcn_conv(x, adj, w1, b1, w2, b2, **kw):
    """Single-graph forward matching GCNConv.forward(x, adj)."""
    return gcn_conv_batched(x[None], adj[None], w1, b1, w2, b2, **kw)[0]


# ----------------------------- references ----------------------------------

def reference_gcn_f32(x, adj, w1, b1, w2, b2):
    """Exact PyTorch-module semantics in f32 (batched via @)."""
    h = jax.nn.relu((adj @ x) @ w1 + b1)
    return (adj @ h) @ w2 + b2


def reference_gcn_bf16_matched(x, adj, w1, b1, w2, b2):
    """Same math as the kernel: bf16 MXU inputs, f32 accumulation,
    layer-2 reassociated. Used for the tight numerical check."""
    bf = jnp.bfloat16
    adj_b = adj.astype(bf)
    ax = jnp.matmul(adj_b, x.astype(bf), preferred_element_type=jnp.float32)
    h = jnp.matmul(ax.astype(bf), w1.astype(bf),
                   preferred_element_type=jnp.float32) + b1
    h = jnp.maximum(h, 0.0)
    hw = jnp.matmul(h.astype(bf), w2.astype(bf),
                    preferred_element_type=jnp.float32)
    return jnp.matmul(adj_b, hw.astype(bf),
                      preferred_element_type=jnp.float32) + b2


if __name__ == "__main__":
    # Small shapes consistent with the module's forward, batched over graphs:
    #   adj: [G, N, N], x: [G, N, input_dim]
    G, N, input_dim, hidden_dim, output_dim = 4, 16, 8, 32, 8

    key = jax.random.PRNGKey(0)
    k_x, k_adj, k_w1, k_b1, k_w2, k_b2 = jax.random.split(key, 6)

    x = jax.random.normal(k_x, (G, N, input_dim), dtype=jnp.float32)
    adj = jax.random.uniform(k_adj, (G, N, N), dtype=jnp.float32)

    # nn.Linear-style uniform init; stored pre-transposed [in, out] (== W^T).
    lim1 = 1.0 / (input_dim ** 0.5)
    lim2 = 1.0 / (hidden_dim ** 0.5)
    w1 = jax.random.uniform(k_w1, (input_dim, hidden_dim), jnp.float32, -lim1, lim1)
    b1 = jax.random.uniform(k_b1, (1, hidden_dim), jnp.float32, -lim1, lim1)
    w2 = jax.random.uniform(k_w2, (hidden_dim, output_dim), jnp.float32, -lim2, lim2)
    b2 = jax.random.uniform(k_b2, (1, output_dim), jnp.float32, -lim2, lim2)

    # Batched forward (grid over graphs, bf16 MXU inputs, f32 accumulation).
    out = jax.block_until_ready(gcn_conv_batched(x, adj, w1, b1, w2, b2))
    assert out.shape == (G, N, output_dim)

    ref_bf = reference_gcn_bf16_matched(x, adj, w1, b1, w2, b2)
    ref_f32 = reference_gcn_f32(x, adj, w1, b1, w2, b2)
    assert jnp.allclose(out, ref_bf, atol=2e-3, rtol=2e-3), \
        "mismatch vs bf16-matched reference"
    # bf16 MXU inputs lose a few mantissa bits vs pure f32; loose sanity check.
    assert jnp.allclose(out, ref_f32, atol=1e-1, rtol=1e-1), \
        "mismatch vs f32 reference"

    # Single-graph API, matching GCNConv.forward(x, adj).
    out1 = jax.block_until_ready(gcn_conv(x[0], adj[0], w1, b1, w2, b2))
    assert out1.shape == (N, output_dim)
    assert jnp.allclose(out1, ref_bf[0], atol=2e-3, rtol=2e-3), \
        "single-graph mismatch"

    # Ragged node count (N not a multiple of 8) exercises the sublane padding.
    Nr = 12
    xr = x[0, :Nr]
    adjr = adj[0, :Nr, :Nr]
    outr = jax.block_until_ready(gcn_conv(xr, adjr, w1, b1, w2, b2))
    refr = reference_gcn_bf16_matched(xr[None], adjr[None], w1, b1, w2, b2)[0]
    assert outr.shape == (Nr, output_dim)
    assert jnp.allclose(outr, refr, atol=2e-3, rtol=2e-3), \
        "ragged-N mismatch"

    print("KERNEL_OK")
</pallas_src>

<mosaic_0001>
module attributes {stable_mosaic.version = 11 : i64} {
  func.func @gcn_kernel(%arg0: i32, %arg1: memref<1x16x16xbf16, #tpu.memory_space<vmem>>, %arg2: memref<1x16x8xbf16, #tpu.memory_space<vmem>>, %arg3: memref<8x32xbf16, #tpu.memory_space<vmem>>, %arg4: memref<1x32xf32, #tpu.memory_space<vmem>>, %arg5: memref<32x128xbf16, #tpu.memory_space<vmem>>, %arg6: memref<1x128xf32, #tpu.memory_space<vmem>>, %arg7: memref<1x16x128xf32, #tpu.memory_space<vmem>>) attributes {dimension_semantics = [#tpu.dimension_semantics<parallel>], iteration_bounds = array<i64: 4>, scalar_prefetch = 0 : i64, scratch_operands = 0 : i64, tpu.core_type = #tpu.core_type<tc>, window_params = [{transform_indices = @transform_0, window_bounds = array<i64: 1, 16, 16>}, {transform_indices = @transform_1, window_bounds = array<i64: 1, 16, 8>}, {pipeline_mode = #tpu.pipeline_mode<synchronous>, transform_indices = @transform_2, window_bounds = array<i64: 8, 32>}, {pipeline_mode = #tpu.pipeline_mode<synchronous>, transform_indices = @transform_3, window_bounds = array<i64: 1, 32>}, {pipeline_mode = #tpu.pipeline_mode<synchronous>, transform_indices = @transform_4, window_bounds = array<i64: 32, 128>}, {pipeline_mode = #tpu.pipeline_mode<synchronous>, transform_indices = @transform_5, window_bounds = array<i64: 1, 128>}, {transform_indices = @transform_6, window_bounds = array<i64: 1, 16, 128>}]} {
    %c0 = arith.constant 0 : index
    %c0_0 = arith.constant 0 : index
    %c0_1 = arith.constant 0 : index
    %0 = vector.load %arg1[%c0, %c0_0, %c0_1] : memref<1x16x16xbf16, #tpu.memory_space<vmem>>, vector<1x16x16xbf16>
    %1 = vector.shape_cast %0 : vector<1x16x16xbf16> to vector<16x16xbf16>
    %c0_2 = arith.constant 0 : index
    %c0_3 = arith.constant 0 : index
    %c0_4 = arith.constant 0 : index
    %2 = vector.load %arg2[%c0_2, %c0_3, %c0_4] : memref<1x16x8xbf16, #tpu.memory_space<vmem>>, vector<1x16x8xbf16>
    %3 = vector.shape_cast %2 : vector<1x16x8xbf16> to vector<16x8xbf16>
    %cst = arith.constant dense<0.000000e+00> : vector<16x8xf32>
    %4 = tpu.matmul %1, %3, %cst {dimension_numbers = #tpu.dot_dimension_numbers<[1], [0], [0], [1], [0, 0, 1, 1], [], []>} : vector<16x16xbf16>, vector<16x8xbf16>, vector<16x8xf32> -> vector<16x8xf32>
    %5 = arith.truncf %4 : vector<16x8xf32> to vector<16x8xbf16>
    %c0_5 = arith.constant 0 : index
    %c0_6 = arith.constant 0 : index
    %6 = vector.load %arg3[%c0_5, %c0_6] : memref<8x32xbf16, #tpu.memory_space<vmem>>, vector<8x32xbf16>
    %cst_7 = arith.constant dense<0.000000e+00> : vector<16x32xf32>
    %7 = tpu.matmul %5, %6, %cst_7 {dimension_numbers = #tpu.dot_dimension_numbers<[1], [0], [0], [1], [0, 0, 1, 1], [], []>} : vector<16x8xbf16>, vector<8x32xbf16>, vector<16x32xf32> -> vector<16x32xf32>
    %c0_8 = arith.constant 0 : index
    %c0_9 = arith.constant 0 : index
    %8 = vector.load %arg4[%c0_8, %c0_9] : memref<1x32xf32, #tpu.memory_space<vmem>>, vector<1x32xf32>
    %9 = vector.broadcast %8 : vector<1x32xf32> to vector<16x32xf32>
    %10 = arith.addf %7, %9 : vector<16x32xf32>
    %cst_10 = arith.constant 0.000000e+00 : f32
    %11 = vector.broadcast %cst_10 : f32 to vector<16x32xf32>
    %12 = arith.maximumf %10, %11 : vector<16x32xf32>
    %13 = arith.truncf %12 : vector<16x32xf32> to vector<16x32xbf16>
    %c0_11 = arith.constant 0 : index
    %c0_12 = arith.constant 0 : index
    %14 = vector.load %arg5[%c0_11, %c0_12] : memref<32x128xbf16, #tpu.memory_space<vmem>>, vector<32x128xbf16>
    %cst_13 = arith.constant dense<0.000000e+00> : vector<16x128xf32>
    %15 = tpu.matmul %13, %14, %cst_13 {dimension_numbers = #tpu.dot_dimension_numbers<[1], [0], [0], [1], [0, 0, 1, 1], [], []>} : vector<16x32xbf16>, vector<32x128xbf16>, vector<16x128xf32> -> vector<16x128xf32>
    %16 = arith.truncf %15 : vector<16x128xf32> to vector<16x128xbf16>
    %cst_14 = arith.constant dense<0.000000e+00> : vector<16x128xf32>
    %17 = tpu.matmul %1, %16, %cst_14 {dimension_numbers = #tpu.dot_dimension_numbers<[1], [0], [0], [1], [0, 0, 1, 1], [], []>} : vector<16x16xbf16>, vector<16x128xbf16>, vector<16x128xf32> -> vector<16x128xf32>
    %c0_15 = arith.constant 0 : index
    %c0_16 = arith.constant 0 : index
    %18 = vector.load %arg6[%c0_15, %c0_16] : memref<1x128xf32, #tpu.memory_space<vmem>>, vector<1x128xf32>
    %19 = vector.broadcast %18 : vector<1x128xf32> to vector<16x128xf32>
    %20 = arith.addf %17, %19 : vector<16x128xf32>
    %c0_17 = arith.constant 0 : index
    %c0_18 = arith.constant 0 : index
    %c0_19 = arith.constant 0 : index
    %21 = vector.load %arg7[%c0_17, %c0_18, %c0_19] : memref<1x16x128xf32, #tpu.memory_space<vmem>>, vector<1x16x128xf32>
    %22 = vector.shape_cast %21 : vector<1x16x128xf32> to vector<16x128xf32>
    %23 = vector.shape_cast %20 : vector<16x128xf32> to vector<1x16x128xf32>
    tpu.vector_store %arg7[%c0_17, %c0_18, %c0_19], %23 {strides = array<i32>} : memref<1x16x128xf32, #tpu.memory_space<vmem>>, vector<1x16x128xf32>,
    return
  }
  func.func @transform_0(%arg0: i32) -> (i32, i32, i32) {
    %c0_i32 = arith.constant 0 : i32
    %c0_i32_0 = arith.constant 0 : i32
    %c0_i32_1 = arith.constant 0 : i32
    return %arg0, %c0_i32, %c0_i32_0 : i32, i32, i32
  }
  func.func @transform_1(%arg0: i32) -> (i32, i32, i32) {
    %c0_i32 = arith.constant 0 : i32
    %c0_i32_0 = arith.constant 0 : i32
    %c0_i32_1 = arith.constant 0 : i32
    return %arg0, %c0_i32, %c0_i32_0 : i32, i32, i32
  }
  func.func @transform_2(%arg0: i32) -> (i32, i32) {
    %c0_i32 = arith.constant 0 : i32
    %c0_i32_0 = arith.constant 0 : i32
    %c0_i32_1 = arith.constant 0 : i32
    return %c0_i32, %c0_i32_0 : i32, i32
  }
  func.func @transform_3(%arg0: i32) -> (i32, i32) {
    %c0_i32 = arith.constant 0 : i32
    %c0_i32_0 = arith.constant 0 : i32
    %c0_i32_1 = arith.constant 0 : i32
    return %c0_i32, %c0_i32_0 : i32, i32
  }
  func.func @transform_4(%arg0: i32) -> (i32, i32) {
    %c0_i32 = arith.constant 0 : i32
    %c0_i32_0 = arith.constant 0 : i32
    %c0_i32_1 = arith.constant 0 : i32
    return %c0_i32, %c0_i32_0 : i32, i32
  }
  func.func @transform_5(%arg0: i32) -> (i32, i32) {
    %c0_i32 = arith.constant 0 : i32
    %c0_i32_0 = arith.constant 0 : i32
    %c0_i32_1 = arith.constant 0 : i32
    return %c0_i32, %c0_i32_0 : i32, i32
  }
  func.func @transform_6(%arg0: i32) -> (i32, i32, i32) {
    %c0_i32 = arith.constant 0 : i32
    %c0_i32_0 = arith.constant 0 : i32
    %c0_i32_1 = arith.constant 0 : i32
    return %arg0, %c0_i32, %c0_i32_0 : i32, i32, i32
  }
}

</mosaic_0001>

<llo_original>
// kernel: tpu_custom_call.1
$region0: #{tpu_custom_call.1}
  #allocation0 [shape = 'u32[]', space=smem, size = 0x4, offset = 0x4, fixed_abs, tag = 'smem constant byte address 0x4 - core index']
  #allocation1 [shape = 'u32[144,128]{1,0:T(1,128)}', space=vmem, size = 0x12000, scoped, tag = 'internal scratch']
  %s0 = inlined_call_operand.vmem [shape: bf16[4,16,16], index: 0, kind: input, shape index: {}]
  %s1 = inlined_call_operand.vmem [shape: bf16[4,16,8], index: 1, kind: input, shape index: {}]
  %s2 = inlined_call_operand.hbm [shape: bf16[8,32], index: 2, kind: input, shape index: {}]
  %s3 = inlined_call_operand.vmem [shape: f32[1,32], index: 3, kind: input, shape index: {}]
  %s4 = inlined_call_operand.vmem [shape: bf16[32,128], index: 4, kind: input, shape index: {}]
  %s5 = inlined_call_operand.vmem [shape: f32[1,128], index: 5, kind: input, shape index: {}]
  %s6 = inlined_call_operand.hbm [shape: f32[4,16,128], index: 6, kind: output, shape index: {}]
  %s7 = sld [smem:[#allocation0]]
  $region61: #{tpu_custom_call.1} parent=0
    _
  %s9 = ssub.s32 1, %s7
  %s10 = scalar_select 0, %s9, %s7
  $region1: #{tpu_custom_call.1} parent=0
    #allocation2 [shape = 'u8[2048]{0}', space=vmem, size = 0x800, scoped, tag = 'input window, operand 2, single buffered']
    #allocation3 [shape = 's32[2]{0}', space=sflag, size = 0x8, scoped, tag = 'scoped memory for tpu_custom_call.1']
    #allocation4 [shape = 's32[2]{0}', space=sflag, size = 0x8, scoped, tag = 'scoped memory for tpu_custom_call.1']
    #allocation5 [shape = 'u8[16384]{0}', space=vmem, size = 0x4000, scoped, tag = 'output window, operand 0']
    %11 = vsyncpa [#allocation3], 0
    %12 = vsyncpa [#allocation4], 0
    %s13 = scalar_lea.sflag [#allocation4], 1
    %14 = vsyncpa %s13, 0
    loop: start=0, step=1, limit=6
    $region2: #{tpu_custom_call.1} parent=1 // loop_pre_header
      _
    $region3: #{tpu_custom_call.1} parent=1 // loop_header
      %s16 = sphi 0, %s20
      %p17 = scmp.ge.s32.totalorder %s16, 6
      %s26 = sphi 0, %s28
      %s29 = sphi 0, %s26
      %s30 = sphi 0, %s29
      %s46 = sphi 0, %s30
      %s52 = sphi 0, %s54
      %s55 = sphi 0, %s52
      %s56 = sphi 0, %s55
      %s72 = sphi 0, %s56
      %s76 = sphi 0, %s76
      %s78 = sphi 0, %s76
      %s79 = sphi 0, %s78
      %s93 = sphi 0, %s79
      %s97 = sphi 0, %s97
      %s99 = sphi 0, %s97
      %s100 = sphi 0, %s99
      %s114 = sphi 0, %s100
      %s118 = sphi 0, %s118
      %s120 = sphi 0, %s118
      %s121 = sphi 0, %s120
      %s135 = sphi 0, %s121
      %s139 = sphi 0, %s139
      %s141 = sphi 0, %s139
      %s142 = sphi 0, %s141
      %s156 = sphi 0, %s142
      %s162 = sphi 0, %s164
      %s165 = sphi 0, %s162
      %s166 = sphi 0, %s165
      %s182 = sphi 0, %s166
    $region4: #{tpu_custom_call.1} parent=1 // loop_header_branch
      %19 = sbr.rel (%p17) target = $region8
    $region5: #{tpu_custom_call.1} parent=1 // loop_body
      %s21 = ssub.s32 %s16, 1
      %s22 = ssub.s32 %s16, 2
      %s23 = sadd.s32 %s16, 1
      %s24 = ssub.s32 %s16, %s23
      %p25 = scmp.eq.s32.totalorder %s24, 0
      %s27 = sadd.s32 %s26, 1
      %s28 = scalar_select %p25, %s26, %s27
      %p31 = pneg %p25
      %p32 = scmp.eq.s32.totalorder %s16, 3
      %p33 = por %p31, %p32
      %p34 = scmp.ne.s32.totalorder %s26, %s29
      %p35 = scmp.eq.s32.totalorder %s16, 0
      %p36 = por %p34, %p35
      %p37 = scmp.ne.s32.totalorder %s26, %s29
      %p38 = scmp.eq.s32.totalorder %s21, 3
      %p39 = por %p37, %p38
      %p40 = scmp.ne.s32.totalorder %s29, %s30
      %p41 = scmp.eq.s32.totalorder %s21, 0
      %p42 = por %p40, %p41
      %p43 = scmp.ne.s32.totalorder %s29, %s30
      %p44 = scmp.eq.s32.totalorder %s22, 3
      %p45 = por %p43, %p44
      %p47 = scmp.ne.s32.totalorder %s30, %s46
      %p48 = scmp.eq.s32.totalorder %s22, 0
      %p49 = por %p47, %p48
      %s50 = ssub.s32 %s16, %s23
      %p51 = scmp.eq.s32.totalorder %s50, 0
      %s53 = sadd.s32 %s52, 1
      %s54 = scalar_select %p51, %s52, %s53
      %p57 = pneg %p51
      %p58 = scmp.eq.s32.totalorder %s16, 3
      %p59 = por %p57, %p58
      %p60 = scmp.ne.s32.totalorder %s52, %s55
      %p61 = scmp.eq.s32.totalorder %s16, 0
      %p62 = por %p60, %p61
      %p63 = scmp.ne.s32.totalorder %s52, %s55
      %p64 = scmp.eq.s32.totalorder %s21, 3
      %p65 = por %p63, %p64
      %p66 = scmp.ne.s32.totalorder %s55, %s56
      %p67 = scmp.eq.s32.totalorder %s21, 0
      %p68 = por %p66, %p67
      %p69 = scmp.ne.s32.totalorder %s55, %s56
      %p70 = scmp.eq.s32.totalorder %s22, 3
      %p71 = por %p69, %p70
      %p73 = scmp.ne.s32.totalorder %s56, %s72
      %p74 = scmp.eq.s32.totalorder %s22, 0
      %p75 = por %p73, %p74
      %s77 = sadd.s32 %s76, 1
      %p80 = scmp.eq.s32.totalorder %s16, 3
      %p81 = scmp.ne.s32.totalorder %s76, %s78
      %p82 = scmp.eq.s32.totalorder %s16, 0
      %p83 = por %p81, %p82
      %p84 = scmp.ne.s32.totalorder %s76, %s78
      %p85 = scmp.eq.s32.totalorder %s21, 3
      %p86 = por %p84, %p85
      %p87 = scmp.ne.s32.totalorder %s78, %s79
      %p88 = scmp.eq.s32.totalorder %s21, 0
      %p89 = por %p87, %p88
      %p90 = scmp.ne.s32.totalorder %s78, %s79
      %p91 = scmp.eq.s32.totalorder %s22, 3
      %p92 = por %p90, %p91
      %p94 = scmp.ne.s32.totalorder %s79, %s93
      %p95 = scmp.eq.s32.totalorder %s22, 0
      %p96 = por %p94, %p95
      %s98 = sadd.s32 %s97, 1
      %p101 = scmp.eq.s32.totalorder %s16, 3
      %p102 = scmp.ne.s32.totalorder %s97, %s99
      %p103 = scmp.eq.s32.totalorder %s16, 0
      %p104 = por %p102, %p103
      %p105 = scmp.ne.s32.totalorder %s97, %s99
      %p106 = scmp.eq.s32.totalorder %s21, 3
      %p107 = por %p105, %p106
      %p108 = scmp.ne.s32.totalorder %s99, %s100
      %p109 = scmp.eq.s32.totalorder %s21, 0
      %p110 = por %p108, %p109
      %p111 = scmp.ne.s32.totalorder %s99, %s100
      %p112 = scmp.eq.s32.totalorder %s22, 3
      %p113 = por %p111, %p112
      %p115 = scmp.ne.s32.totalorder %s100, %s114
      %p116 = scmp.eq.s32.totalorder %s22, 0
      %p117 = por %p115, %p116
      %s119 = sadd.s32 %s118, 1
      %p122 = scmp.eq.s32.totalorder %s16, 3
      %p123 = scmp.ne.s32.totalorder %s118, %s120
      %p124 = scmp.eq.s32.totalorder %s16, 0
      %p125 = por %p123, %p124
      %p126 = scmp.ne.s32.totalorder %s118, %s120
      %p127 = scmp.eq.s32.totalorder %s21, 3
      %p128 = por %p126, %p127
      %p129 = scmp.ne.s32.totalorder %s120, %s121
      %p130 = scmp.eq.s32.totalorder %s21, 0
      %p131 = por %p129, %p130
      %p132 = scmp.ne.s32.totalorder %s120, %s121
      %p133 = scmp.eq.s32.totalorder %s22, 3
      %p134 = por %p132, %p133
      %p136 = scmp.ne.s32.totalorder %s121, %s135
      %p137 = scmp.eq.s32.totalorder %s22, 0
      %p138 = por %p136, %p137
      %s140 = sadd.s32 %s139, 1
      %p143 = scmp.eq.s32.totalorder %s16, 3
      %p144 = scmp.ne.s32.totalorder %s139, %s141
      %p145 = scmp.eq.s32.totalorder %s16, 0
      %p146 = por %p144, %p145
      %p147 = scmp.ne.s32.totalorder %s139, %s141
      %p148 = scmp.eq.s32.totalorder %s21, 3
      %p149 = por %p147, %p148
      %p150 = scmp.ne.s32.totalorder %s141, %s142
      %p151 = scmp.eq.s32.totalorder %s21, 0
      %p152 = por %p150, %p151
      %p153 = scmp.ne.s32.totalorder %s141, %s142
      %p154 = scmp.eq.s32.totalorder %s22, 3
      %p155 = por %p153, %p154
      %p157 = scmp.ne.s32.totalorder %s142, %s156
      %p158 = scmp.eq.s32.totalorder %s22, 0
      %p159 = por %p157, %p158
      %s160 = ssub.s32 %s16, %s23
      %p161 = scmp.eq.s32.totalorder %s160, 0
      %s163 = sadd.s32 %s162, 1
      %s164 = scalar_select %p161, %s162, %s163
      %p167 = pneg %p161
      %p168 = scmp.eq.s32.totalorder %s16, 3
      %p169 = por %p167, %p168
      %p170 = scmp.ne.s32.totalorder %s162, %s165
      %p171 = scmp.eq.s32.totalorder %s16, 0
      %p172 = por %p170, %p171
      %p173 = scmp.ne.s32.totalorder %s162, %s165
      %p174 = scmp.eq.s32.totalorder %s21, 3
      %p175 = por %p173, %p174
      %p176 = scmp.ne.s32.totalorder %s165, %s166
      %p177 = scmp.eq.s32.totalorder %s21, 0
      %p178 = por %p176, %p177
      %p179 = scmp.ne.s32.totalorder %s165, %s166
      %p180 = scmp.eq.s32.totalorder %s22, 3
      %p181 = por %p179, %p180
      %p183 = scmp.ne.s32.totalorder %s166, %s182
      %p184 = scmp.eq.s32.totalorder %s22, 0
      %p185 = por %p183, %p184
      %p186 = scmp.le.s32.totalorder 1, %s16
      %p187 = scmp.lt.s32.totalorder %s16, 5
      %p188 = pnand %p186, %p187
      %p189 = pneg %p188
      // Predicated region
      $region9: #{tpu_custom_call.1} parent=5 // pred_check
        _
      $region10: #{tpu_custom_call.1} parent=5 // pred_check_branch
        %191 = sbr.rel (%p188) target = $region12
      $region11: #{tpu_custom_call.1} parent=5 // pred_region
        %s192 = ssub.s32 %s16, 1
        // Predicated region
        $region13: #{tpu_custom_call.1} parent=11 // pred_check
          %p193 = pneg %p89
        $region14: #{tpu_custom_call.1} parent=11 // pred_check_branch
          %195 = sbr.rel (%p193) target = $region16
        $region15: #{tpu_custom_call.1} parent=11 // pred_region
          %s197 = ssub.s32 64, 64
          %198 = vsyncadd [#allocation3], %s197
          %s200 = sshll.u32 [#allocation2], 4
          %s201 = int_to_ptr.vmem [resolvable:$true] %s200
          %203 = dma.hbm_to_vmem [thread:$0]  %s2, 64, %s201, [#allocation3]
        $region16: #{tpu_custom_call.1} parent=11 // pred_fallthru
          _
        // Predicated region
        $region17: #{tpu_custom_call.1} parent=11 // pred_check
          %p204 = pneg %p110
        $region18: #{tpu_custom_call.1} parent=11 // pred_check_branch
          %206 = sbr.rel (%p204) target = $region20
        $region19: #{tpu_custom_call.1} parent=11 // pred_region
          _
        $region20: #{tpu_custom_call.1} parent=11 // pred_fallthru
          _
        // Predicated region
        $region21: #{tpu_custom_call.1} parent=11 // pred_check
          %p207 = pneg %p131
        $region22: #{tpu_custom_call.1} parent=11 // pred_check_branch
          %209 = sbr.rel (%p207) target = $region24
        $region23: #{tpu_custom_call.1} parent=11 // pred_region
          _
        $region24: #{tpu_custom_call.1} parent=11 // pred_fallthru
          _
        // Predicated region
        $region25: #{tpu_custom_call.1} parent=11 // pred_check
          %p210 = pneg %p152
        $region26: #{tpu_custom_call.1} parent=11 // pred_check_branch
          %212 = sbr.rel (%p210) target = $region28
        $region27: #{tpu_custom_call.1} parent=11 // pred_region
          _
        $region28: #{tpu_custom_call.1} parent=11 // pred_fallthru
          _
      $region12: #{tpu_custom_call.1} parent=5 // pred_fallthru
        _
      %p213 = scmp.lt.s32.totalorder %s16, 4
      // Predicated region
      $region29: #{tpu_custom_call.1} parent=5 // pred_check
        %p214 = pneg %p213
      $region30: #{tpu_custom_call.1} parent=5 // pred_check_branch
        %216 = sbr.rel (%p214) target = $region32
      $region31: #{tpu_custom_call.1} parent=5 // pred_region
        // Predicated region
        $region33: #{tpu_custom_call.1} parent=31 // pred_check
          %p217 = pneg %p36
        $region34: #{tpu_custom_call.1} parent=31 // pred_check_branch
          %219 = sbr.rel (%p217) target = $region36
        $region35: #{tpu_custom_call.1} parent=31 // pred_region
          %p220 = scmp.lt.s32.totalorder %s16, 3
          %s221 = scalar_select %p220, %s16, 3
          %s222 = smul.addr %s221, 2
          %s223 = smul.addr %s222, 4
          %s224 = scalar_lea.vmem %s0, %s223
        $region36: #{tpu_custom_call.1} parent=31 // pred_fallthru
          _
        // Predicated region
        $region37: #{tpu_custom_call.1} parent=31 // pred_check
          %p225 = pneg %p62
        $region38: #{tpu_custom_call.1} parent=31 // pred_check_branch
          %227 = sbr.rel (%p225) target = $region40
        $region39: #{tpu_custom_call.1} parent=31 // pred_region
          %p228 = scmp.lt.s32.totalorder %s16, 3
          %s229 = scalar_select %p228, %s16, 3
          %s230 = smul.addr %s229, 2
          %s231 = smul.addr %s230, 4
          %s232 = scalar_lea.vmem %s1, %s231
        $region40: #{tpu_custom_call.1} parent=31 // pred_fallthru
          _
      $region32: #{tpu_custom_call.1} parent=5 // pred_fallthru
        _
      %p233 = scmp.le.s32.totalorder 1, %s16
      %p234 = scmp.lt.s32.totalorder %s16, 5
      %p235 = pnand %p233, %p234
      %p236 = pneg %p235
      // Predicated region
      $region41: #{tpu_custom_call.1} parent=5 // pred_check
        _
      $region42: #{tpu_custom_call.1} parent=5 // pred_check_branch
        %238 = sbr.rel (%p235) target = $region44
      $region43: #{tpu_custom_call.1} parent=5 // pred_region
        %s239 = ssub.s32 %s16, 1
        // Predicated region
        $region45: #{tpu_custom_call.1} parent=43 // pred_check
          %p240 = pneg %p89
        $region46: #{tpu_custom_call.1} parent=43 // pred_check_branch
          %242 = sbr.rel (%p240) target = $region48
        $region47: #{tpu_custom_call.1} parent=43 // pred_region
          %243 = dma.done [#allocation3], 64
        $region48: #{tpu_custom_call.1} parent=43 // pred_fallthru
          _
        %p244 = scmp.lt.s32.totalorder %s21, 3
        %s245 = scalar_select %p244, %s21, 3
        %s246 = smul.addr %s245, 2
        %s247 = smul.addr %s246, 4
        %s248 = scalar_lea.vmem %s0, %s247
        %p249 = pneg %p42
        %p250 = pneg %p39
        %p251 = scmp.lt.s32.totalorder %s21, 3
        %s252 = scalar_select %p251, %s21, 3
        %s253 = smul.addr %s252, 2
        %s254 = smul.addr %s253, 4
        %s255 = scalar_lea.vmem %s1, %s254
        %p256 = pneg %p68
        %p257 = pneg %p65
        %p258 = pneg %p89
        %p259 = pneg %p86
        %p260 = pneg %p110
        %p261 = pneg %p107
        %p262 = pneg %p131
        %p263 = pneg %p128
        %p264 = pneg %p152
        %p265 = pneg %p149
        %p266 = pneg %p178
        %p267 = pneg %p175
        %s268 = sand.u32 %s165, 1
        %s269 = scalar_lea.sflag [#allocation4], %s268
        %s270 = sand.u32 %s165, 1
        %s271 = smul.addr %s270, 16
        %s272 = scalar_lea.vmem [#allocation5], %s271
        %p273 = scmp.lt.s32.totalorder %s21, 3
        %s274 = scalar_select %p273, %s21, 3
        %s275 = smul.addr %s274, 2
        %s276 = smul.addr %s275, 4
        %s277 = scalar_lea.vmem %s0, %s276
        %p278 = scmp.lt.s32.totalorder %s21, 3
        %s279 = scalar_select %p278, %s21, 3
        %s280 = smul.addr %s279, 2
        %s281 = smul.addr %s280, 4
        %s282 = scalar_lea.vmem %s1, %s281
        %v284 = vld [vmem:[%s277] sm:$0xf]
        %v285 = vld [vmem:[%s277 + $0x4] sm:$0xf]
        %v286 = vld [vmem:[%s282] sm:$0xf]
        %v287 = vld [vmem:[%s282 + $0x4] sm:$0xf]
        %v290 = vunpack.c.l.b16 %v284
        %v291 = vunpack.c.l.b16 %v285
        %v292 = vpack.c.b16 %v291, %v290
        %v295 = vunpack.c.l.b16 %v286
        %v296 = vunpack.c.l.b16 %v287
        %v297 = vpack.c.b16 %v296, %v295
        %vm299 = vcmask 130048
        %v301 = vsel %vm299, %v292, 0
        %303 = vmatprep.subr.bf16.mxu0 0
        %304 = vmatpush1.bf16.msra.mxu0 0
        %305 = vmatprep.subr.bf16.mxu0 0
        %306 = vmatpush1.bf16.msra.mxu0 0
        %307 = vmatprep.subr.bf16.mxu0 0
        %308 = vmatpush1.bf16.msra.mxu0 0
        %309 = vmatprep.subr.bf16.mxu0 0
        %310 = vmatpush1.bf16.msra.mxu0 0
        %311 = vmatprep.subr.bf16.mxu0 0
        %312 = vmatpush1.bf16.msra.mxu0 0
        %313 = vmatprep.subr.bf16.mxu0 0
        %314 = vmatpush1.bf16.msra.mxu0 0
        %315 = vmatprep.subr.bf16.mxu0 0
        %316 = vmatpush1.bf16.msra.mxu0 0
        %317 = vmatprep.subr.bf16.mxu0 0
        %318 = vmatpush1.bf16.msra.mxu0 %v297
        %319 = vmatprep.subr.bf16.mxu0 0
        %320 = vmatpush2.bf16.msra.mxu0 0
        %321 = vmatprep.subr.bf16.mxu0 0
        %322 = vmatpush2.bf16.msra.mxu0 0
        %323 = vmatprep.subr.bf16.mxu0 0
        %324 = vmatpush2.bf16.msra.mxu0 0
        %325 = vmatprep.subr.bf16.mxu0 0
        %326 = vmatpush2.bf16.msra.mxu0 0
        %327 = vmatprep.subr.bf16.mxu0 0
        %328 = vmatpush2.bf16.msra.mxu0 0
        %329 = vmatprep.subr.bf16.mxu0 0
        %330 = vmatpush2.bf16.msra.mxu0 0
        %331 = vmatprep.subr.bf16.mxu0 0
        %332 = vmatpush2.bf16.msra.mxu0 0
        %333 = vmatprep.subr.bf16.mxu0 0
        %334 = vmatpush2.bf16.msra.mxu0 0
        %335 = vmatprep.mubr.bf16.mxu0 0
        %336 = vmatmul.mubr.bf16.gmra.mxu0 %v301
        %v337 = vpop.f32.mrf.mxu0
        %v338 = vadd.f32 0.0, %v337
        %v339 = vpop.f32.mrf.mxu0
        %v340 = vpop.f32.mrf.mxu0
        %v341 = vadd.f32 0.0, %v340
        %v342 = vpop.f32.mrf.mxu0
        %343 = vdwg.mxu0
        %v344 = vpack.c.bf16 %v341, %v338
        %v345 = vld [vmem:[#allocation2] sm:$0xf]
        %v346 = vld [vmem:[%s3] sm:$0x1]
        %v348 = vlaneseq
        %v349 = vshrl.u32 %v348, 7
        %v350 = vsub.s32 0, %v349
        %v351 = vrot.slane %v346, %v350
        %vm353 = vcmask 64512
        %v355 = vsel %vm353, %v344, 0
        %vm357 = vcmask 1043456
        %v359 = vsel %vm357, %v345, 0
        %361 = vmatprep.subr.bf16.mxu0 0
        %362 = vmatpush1.bf16.msra.mxu0 0
        %363 = vmatprep.subr.bf16.mxu0 0
        %364 = vmatpush1.bf16.msra.mxu0 0
        %365 = vmatprep.subr.bf16.mxu0 0
        %366 = vmatpush1.bf16.msra.mxu0 0
        %367 = vmatprep.subr.bf16.mxu0 0
        %368 = vmatpush1.bf16.msra.mxu0 0
        %369 = vmatprep.subr.bf16.mxu0 0
        %370 = vmatpush1.bf16.msra.mxu0 0
        %371 = vmatprep.subr.bf16.mxu0 0
        %372 = vmatpush1.bf16.msra.mxu0 0
        %373 = vmatprep.subr.bf16.mxu0 0
        %374 = vmatpush1.bf16.msra.mxu0 0
        %375 = vmatprep.subr.bf16.mxu0 0
        %376 = vmatpush1.bf16.msra.mxu0 %v359
        %377 = vmatprep.subr.bf16.mxu0 0
        %378 = vmatpush2.bf16.msra.mxu0 0
        %379 = vmatprep.subr.bf16.mxu0 0
        %380 = vmatpush2.bf16.msra.mxu0 0
        %381 = vmatprep.subr.bf16.mxu0 0
        %382 = vmatpush2.bf16.msra.mxu0 0
        %383 = vmatprep.subr.bf16.mxu0 0
        %384 = vmatpush2.bf16.msra.mxu0 0
        %385 = vmatprep.subr.bf16.mxu0 0
        %386 = vmatpush2.bf16.msra.mxu0 0
        %387 = vmatprep.subr.bf16.mxu0 0
        %388 = vmatpush2.bf16.msra.mxu0 0
        %389 = vmatprep.subr.bf16.mxu0 0
        %390 = vmatpush2.bf16.msra.mxu0 0
        %391 = vmatprep.subr.bf16.mxu0 0
        %392 = vmatpush2.bf16.msra.mxu0 0
        %393 = vmatprep.mubr.bf16.mxu0 0
        %394 = vmatmul.mubr.bf16.gmra.mxu0 %v355
        %v395 = vpop.f32.mrf.mxu0
        %v396 = vadd.f32 %v351, %v395
        %v397 = vpop.f32.mrf.mxu0
        %v398 = vpop.f32.mrf.mxu0
        %v399 = vadd.f32 %v351, %v398
        %v400 = vpop.f32.mrf.mxu0
        %401 = vdwg.mxu0
        %v402 = vmax.f32 %v396, 0.0
        %v403 = vmax.f32 %v399, 0.0
        %v404 = vpack.c.bf16 %v403, %v402
        %v405 = vld [vmem:[%s4] sm:$0xf]
        %v406 = vld [vmem:[%s4 + $0x4] sm:$0xf]
        %v407 = vld [vmem:[%s4 + $0x8] sm:$0xf]
        %v408 = vld [vmem:[%s4 + $0xc] sm:$0xf]
        %v413 = vunpack.c.l.b16 %v405
        %v414 = vunpack.c.l.b16 %v406
        %v415 = vunpack.c.l.b16 %v407
        %v416 = vunpack.c.l.b16 %v408
        %v417 = vpack.c.b16 %v414, %v413
        %v418 = vpack.c.b16 %v416, %v415
        %vm421 = vcmask 261120
        %v423 = vsel %vm421, %v404, 0
        %425 = vmatprep.subr.bf16.mxu0 0
        %426 = vmatpush1.bf16.msra.mxu0 0
        %427 = vmatprep.subr.bf16.mxu0 0
        %428 = vmatpush1.bf16.msra.mxu0 0
        %429 = vmatprep.subr.bf16.mxu0 0
        %430 = vmatpush1.bf16.msra.mxu0 0
        %431 = vmatprep.subr.bf16.mxu0 0
        %432 = vmatpush1.bf16.msra.mxu0 0
        %433 = vmatprep.subr.bf16.mxu0 0
        %434 = vmatpush1.bf16.msra.mxu0 0
        %435 = vmatprep.subr.bf16.mxu0 0
        %436 = vmatpush1.bf16.msra.mxu0 0
        %437 = vmatprep.subr.bf16.mxu0 0
        %438 = vmatpush1.bf16.msra.mxu0 %v418
        %439 = vmatprep.subr.bf16.mxu0 0
        %440 = vmatpush1.bf16.msra.mxu0 %v417
        %441 = vmatprep.subr.bf16.mxu0 0
        %442 = vmatpush2.bf16.msra.mxu0 0
        %443 = vmatprep.subr.bf16.mxu0 0
        %444 = vmatpush2.bf16.msra.mxu0 0
        %445 = vmatprep.subr.bf16.mxu0 0
        %446 = vmatpush2.bf16.msra.mxu0 0
        %447 = vmatprep.subr.bf16.mxu0 0
        %448 = vmatpush2.bf16.msra.mxu0 0
        %449 = vmatprep.subr.bf16.mxu0 0
        %450 = vmatpush2.bf16.msra.mxu0 0
        %451 = vmatprep.subr.bf16.mxu0 0
        %452 = vmatpush2.bf16.msra.mxu0 0
        %453 = vmatprep.subr.bf16.mxu0 0
        %454 = vmatpush2.bf16.msra.mxu0 0
        %455 = vmatprep.subr.bf16.mxu0 0
        %456 = vmatpush2.bf16.msra.mxu0 0
        %457 = vmatprep.mubr.bf16.mxu0 0
        %458 = vmatmul.mubr.bf16.gmra.mxu0 %v423
        %v459 = vpop.f32.mrf.mxu0
        %v460 = vadd.f32 0.0, %v459
        %v461 = vpop.f32.mrf.mxu0
        %v462 = vpop.f32.mrf.mxu0
        %v463 = vadd.f32 0.0, %v462
        %v464 = vpop.f32.mrf.mxu0
        %465 = vdwg.mxu0
        %v466 = vpack.c.bf16 %v463, %v460
        %v467 = vld [vmem:[%s5] sm:$0x1]
        %v469 = vlaneseq
        %v470 = vshrl.u32 %v469, 7
        %v471 = vsub.s32 0, %v470
        %v472 = vrot.slane %v467, %v471
        %474 = vmatprep.subr.bf16.mxu0 0
        %475 = vmatpush1.bf16.msra.mxu0 0
        %476 = vmatprep.subr.bf16.mxu0 0
        %477 = vmatpush1.bf16.msra.mxu0 0
        %478 = vmatprep.subr.bf16.mxu0 0
        %479 = vmatpush1.bf16.msra.mxu0 0
        %480 = vmatprep.subr.bf16.mxu0 0
        %481 = vmatpush1.bf16.msra.mxu0 0
        %482 = vmatprep.subr.bf16.mxu0 0
        %483 = vmatpush1.bf16.msra.mxu0 0
        %484 = vmatprep.subr.bf16.mxu0 0
        %485 = vmatpush1.bf16.msra.mxu0 0
        %486 = vmatprep.subr.bf16.mxu0 0
        %487 = vmatpush1.bf16.msra.mxu0 0
        %488 = vmatprep.subr.bf16.mxu0 0
        %489 = vmatpush1.bf16.msra.mxu0 %v466
        %490 = vmatprep.subr.bf16.mxu0 0
        %491 = vmatpush2.bf16.msra.mxu0 0
        %492 = vmatprep.subr.bf16.mxu0 0
        %493 = vmatpush2.bf16.msra.mxu0 0
        %494 = vmatprep.subr.bf16.mxu0 0
        %495 = vmatpush2.bf16.msra.mxu0 0
        %496 = vmatprep.subr.bf16.mxu0 0
        %497 = vmatpush2.bf16.msra.mxu0 0
        %498 = vmatprep.subr.bf16.mxu0 0
        %499 = vmatpush2.bf16.msra.mxu0 0
        %500 = vmatprep.subr.bf16.mxu0 0
        %501 = vmatpush2.bf16.msra.mxu0 0
        %502 = vmatprep.subr.bf16.mxu0 0
        %503 = vmatpush2.bf16.msra.mxu0 0
        %504 = vmatprep.subr.bf16.mxu0 0
        %505 = vmatpush2.bf16.msra.mxu0 0
        %506 = vmatprep.mubr.bf16.mxu0 0
        %507 = vmatmul.mubr.bf16.gmra.mxu0 %v301
        %v508 = vpop.f32.mrf.mxu0
        %v509 = vadd.f32 %v472, %v508
        %v510 = vpop.f32.mrf.mxu0
        %v511 = vpop.f32.mrf.mxu0
        %v512 = vadd.f32 %v472, %v511
        %v513 = vpop.f32.mrf.mxu0
        %514 = vdwg.mxu0
        %515 = vst [vmem:[%s272] sm:$0xff] %v509
        %516 = vst [vmem:[%s272 + $0x8] sm:$0xff] %v512
        %s517 = sand.u32 %s165, 1
        %s518 = scalar_lea.sflag [#allocation4], %s517
        %s519 = sand.u32 %s165, 1
        %s520 = smul.addr %s519, 16
        %s521 = scalar_lea.vmem [#allocation5], %s520
        // Predicated region
        $region49: #{tpu_custom_call.1} parent=43 // pred_check
          %p522 = pneg %p175
        $region50: #{tpu_custom_call.1} parent=43 // pred_check_branch
          %524 = sbr.rel (%p522) target = $region52
        $region51: #{tpu_custom_call.1} parent=43 // pred_region
          %s526 = ssub.s32 256, 256
          %527 = vsyncadd %s518, %s526
          %s528 = smul.addr %s21, 2
          %s529 = smul.addr %s528, 128
          %s530 = scalar_lea.hbm %s6, %s529
          %s531 = sshll.u32 %s521, 4
          %s532 = int_to_ptr.vmem [resolvable:$true] %s531
          %537 = dma.vmem_to_hbm [thread:$0]  %s532, 256, %s530, %s518, 128, 128, 8
        $region52: #{tpu_custom_call.1} parent=43 // pred_fallthru
          _
      $region44: #{tpu_custom_call.1} parent=5 // pred_fallthru
        _
      %p538 = scmp.le.s32.totalorder 2, %s16
      // Predicated region
      $region53: #{tpu_custom_call.1} parent=5 // pred_check
        %p539 = pneg %p538
      $region54: #{tpu_custom_call.1} parent=5 // pred_check_branch
        %541 = sbr.rel (%p539) target = $region56
      $region55: #{tpu_custom_call.1} parent=5 // pred_region
        %s542 = ssub.s32 %s16, 2
        // Predicated region
        $region57: #{tpu_custom_call.1} parent=55 // pred_check
          %p543 = pneg %p181
        $region58: #{tpu_custom_call.1} parent=55 // pred_check_branch
          %545 = sbr.rel (%p543) target = $region60
        $region59: #{tpu_custom_call.1} parent=55 // pred_region
          %s546 = sand.u32 %s166, 1
          %s547 = scalar_lea.sflag [#allocation4], %s546
          %s548 = sand.u32 %s166, 1
          %s549 = smul.addr %s548, 16
          %s550 = scalar_lea.vmem [#allocation5], %s549
          %551 = dma.done %s547, 256
        $region60: #{tpu_custom_call.1} parent=55 // pred_fallthru
          _
      $region56: #{tpu_custom_call.1} parent=5 // pred_fallthru
        _
    $region6: #{tpu_custom_call.1} parent=1 // loop_footer
      %s20 = sadd.s32 1, %s16
    $region7: #{tpu_custom_call.1} parent=1 // loop_footer_branch
      %15 = sbr.rel target = $region3
    $region8: #{tpu_custom_call.1} parent=1 // loop_exit
      _
    %552 = vsyncpa [#allocation3], 1
    %s553 = scalar_lea.sflag [#allocation3], 1
    %554 = vsyncpa %s553, 1
    %555 = vsyncpa [#allocation4], 1
    %s556 = scalar_lea.sflag [#allocation4], 1
    %557 = vsyncpa %s556, 1

</llo_original>
